<compile_context>
chip_gen: v7x
topology: tpu7x:2x2x1
jax: 0.10.0
libtpu: 0.0.40
codegen_flags: <defaults>
</compile_context>

<pallas_src>
import functools

import jax
import jax.numpy as jnp
from jax.experimental import pallas as pl
from jax.experimental.pallas import tpu as pltpu


def _head_kernel(x_ref, w_ref, b_ref, o_ref, acc_ref, *,
                 pool_method, fold, c, inv_s):
    # x_ref:   (tn, ts, cp)  streaming input tile, native dtype (cp = fold*c)
    # w_ref:   (c, K)        Linear weight, pre-transposed (x @ W)
    # b_ref:   (1, K)        Linear bias
    # o_ref:   (tn, K)       output tile (written only on the last S step)
    # acc_ref: (tn, cp) f32  running sum / running max
    s_idx = pl.program_id(1)
    is_avg = pool_method in ("avg", "mean")

    @pl.when(s_idx == 0)
    def _init():
        if is_avg:
            acc_ref[...] = jnp.zeros_like(acc_ref)
        else:
            acc_ref[...] = jnp.full_like(acc_ref, -jnp.inf)

    x = x_ref[...]  # keep native dtype; no whole-tile upcast
    if is_avg:
        acc_ref[...] += jnp.sum(x, axis=1, dtype=jnp.float32)
    else:
        acc_ref[...] = jnp.maximum(acc_ref[...],
                                   jnp.max(x, axis=1).astype(jnp.float32))

    @pl.when(s_idx == pl.num_programs(1) - 1)
    def _finalize():
        acc = acc_ref[...]                       # (tn, fold*c) f32
        if fold > 1:
            # Fold the lane-packed accumulator back to (tn, c).
            red = acc[:, 0:c]
            for j in range(1, fold):
                part = acc[:, j * c:(j + 1) * c]
                red = red + part if is_avg else jnp.maximum(red, part)
            acc = red                            # (tn, c)
        # bf16 MXU path for bf16 weights; full f32 otherwise (matches reference).
        mm_dtype = jnp.bfloat16 if w_ref.dtype == jnp.bfloat16 else jnp.float32
        out = jnp.dot(acc.astype(mm_dtype), w_ref[...].astype(mm_dtype),
                      preferred_element_type=jnp.float32)
        if is_avg:
            out = out * inv_s                    # fold 1/S on the tiny (tn, K)
        out = out + b_ref[...].astype(jnp.float32)
        o_ref[...] = out.astype(o_ref.dtype)


def pool_classification_head(x, weight, bias, *, pool_method="avg",
                             tn_max=128, x_block_bytes=4 * 1024 * 1024):
    """x: (N, *spatial, C); weight: (num_classes, C); bias: (num_classes,)."""
    assert pool_method in ("avg", "mean", "max")
    n = x.shape[0]
    c = x.shape[-1]
    s = 1
    for d in x.shape[1:-1]:
        s *= d
    k = weight.shape[0]

    x_flat = x.reshape(n, s, c)                  # contiguous, free in XLA

    # Lane-dense packing: with C < 128 each vreg would carry only C useful
    # lanes; pack r consecutive spatial positions into the lane axis.
    fold = 1
    if c < 128 and 128 % c == 0:
        r = 128 // c
        if s % r == 0:
            fold = r
    cp = fold * c
    sp = s // fold
    if fold > 1:
        x_flat = x_flat.reshape(n, sp, cp)

    # --- tile sizing (kept within the 32 MiB scoped-VMEM default everywhere;
    # on v6e/v5e you can raise x_block_bytes + vmem_limit_bytes for bigger tiles).
    if n <= tn_max:
        tn = n                                   # block == full batch dim
    else:
        tn = max(8, (tn_max // 8) * 8)           # keep sublane-friendly tiles
    dtype_bytes = jnp.dtype(x.dtype).itemsize
    ts = max(8, x_block_bytes // max(1, tn * cp * dtype_bytes))
    ts = min(ts, sp)
    if ts < sp:
        ts = max(8, (ts // 8) * 8)               # (8,128) block constraint

    # --- padding so the grid tiles evenly; padding is result-neutral:
    # S pads with 0 (sum) / -inf (max), padded batch rows are sliced off.
    n_pad = (-n) % tn
    s_pad = (-sp) % ts
    if s_pad:
        pad_val = 0.0 if pool_method in ("avg", "mean") else -jnp.inf
        x_flat = jnp.pad(x_flat, ((0, 0), (0, s_pad), (0, 0)),
                         constant_values=pad_val)
    if n_pad:
        x_flat = jnp.pad(x_flat, ((0, n_pad), (0, 0), (0, 0)))
    np_, spp = n + n_pad, sp + s_pad

    w_t = weight.T                               # (C, K)
    b2 = bias.reshape(1, k)                      # (1, K)

    kernel = functools.partial(_head_kernel, pool_method=pool_method,
                               fold=fold, c=c, inv_s=1.0 / float(s))

    grid = (np_ // tn, spp // ts)
    grid_spec = pltpu.PrefetchScalarGridSpec(
        num_scalar_prefetch=0,
        grid=grid,
        in_specs=[
            pl.BlockSpec((tn, ts, cp), lambda i, si: (i, si, 0)),
            pl.BlockSpec((c, k), lambda i, si: (0, 0)),
            pl.BlockSpec((1, k), lambda i, si: (0, 0)),
        ],
        out_specs=pl.BlockSpec((tn, k), lambda i, si: (i, 0)),
        scratch_shapes=[pltpu.VMEM((tn, cp), jnp.float32)],
    )

    out = pl.pallas_call(
        kernel,
        out_shape=jax.ShapeDtypeStruct((np_, k), x.dtype),
        grid_spec=grid_spec,
        compiler_params=pltpu.CompilerParams(
            # batch axis shards across TensorCores (v7x); S is the reduction.
            dimension_semantics=("parallel", "arbitrary")),
    )(x_flat, w_t, b2)

    if n_pad:
        out = out[:n]
    return out


def _reference(x, weight, bias, pool_method):
    ndim = x.ndim - 2
    axes = tuple(range(1, 1 + ndim))
    if pool_method in ("avg", "mean"):
        pooled = jnp.mean(x, axis=axes)
    else:
        pooled = jnp.max(x, axis=axes)
    return pooled @ weight.T + bias


if __name__ == "__main__":
    key = jax.random.PRNGKey(0)
    ok = True

    # Config 1: module-default-ish small shapes (single grid step, lane fold r=4).
    # Config 2: tiny per-block budget to force N-tiling, S-tiling, ragged padding
    #           and multi-step accumulation through the same code path.
    configs = [
        dict(N=2, spatial=(16, 16), C=32, K=8, tn_max=128,
             x_block_bytes=4 * 1024 * 1024),
        dict(N=12, spatial=(10, 10), C=32, K=8, tn_max=8,
             x_block_bytes=4096),
    ]

    for cfg in configs:
        N, C, K = cfg["N"], cfg["C"], cfg["K"]
        kx, kw, kb, key = jax.random.split(key, 4)
        x = jax.random.normal(kx, (N, *cfg["spatial"], C), dtype=jnp.float32)

        # nn.Linear(C, K) default init: U(-1/sqrt(C), 1/sqrt(C))
        bound = 1.0 / (C ** 0.5)
        weight = jax.random.uniform(kw, (K, C), minval=-bound, maxval=bound,
                                    dtype=jnp.float32)
        bias = jax.random.uniform(kb, (K,), minval=-bound, maxval=bound,
                                  dtype=jnp.float32)

        for pool_method in ("avg", "max"):
            out = pool_classification_head(
                x, weight, bias, pool_method=pool_method,
                tn_max=cfg["tn_max"], x_block_bytes=cfg["x_block_bytes"])
            out = jax.block_until_ready(out)
            ref = _reference(x, weight, bias, pool_method)
            if not jnp.allclose(out, ref, atol=3e-5, rtol=3e-5):
                ok = False
                print(f"MISMATCH N={N} spatial={cfg['spatial']} "
                      f"pool={pool_method}: "
                      f"max abs err = {jnp.max(jnp.abs(out - ref))}")

    if ok:
        print("KERNEL_OK")
</pallas_src>

<mosaic_0001>
module attributes {stable_mosaic.version = 11 : i64} {
  func.func @_head_kernel(%arg0: i32, %arg1: i32, %arg2: memref<2x64x128xf32, #tpu.memory_space<vmem>>, %arg3: memref<32x8xf32, #tpu.memory_space<vmem>>, %arg4: memref<1x8xf32, #tpu.memory_space<vmem>>, %arg5: memref<2x8xf32, #tpu.memory_space<vmem>>, %arg6: memref<2x128xf32, #tpu.memory_space<vmem>>) attributes {dimension_semantics = [#tpu.dimension_semantics<parallel>, #tpu.dimension_semantics<arbitrary>], iteration_bounds = array<i64: 1, 1>, scalar_prefetch = 0 : i64, scratch_operands = 1 : i64, tpu.core_type = #tpu.core_type<tc>, window_params = [{transform_indices = @transform_0, window_bounds = array<i64: 2, 64, 128>}, {pipeline_mode = #tpu.pipeline_mode<synchronous>, transform_indices = @transform_1, window_bounds = array<i64: 32, 8>}, {pipeline_mode = #tpu.pipeline_mode<synchronous>, transform_indices = @transform_2, window_bounds = array<i64: 1, 8>}, {transform_indices = @transform_3, window_bounds = array<i64: 2, 8>}]} {
    %c0_i32 = arith.constant 0 : i32
    %0 = arith.cmpi eq, %arg1, %c0_i32 : i32
    %1 = arith.extui %0 : i1 to i32
    %c0_i32_0 = arith.constant 0 : i32
    %2 = arith.cmpi ne, %1, %c0_i32_0 : i32
    scf.if %2 {
      %cst_9 = arith.constant 0.000000e+00 : f32
      %11 = vector.broadcast %cst_9 : f32 to vector<2x128xf32>
      %c0_10 = arith.constant 0 : index
      %c0_11 = arith.constant 0 : index
      %12 = vector.load %arg6[%c0_10, %c0_11] : memref<2x128xf32, #tpu.memory_space<vmem>>, vector<2x128xf32>
      tpu.vector_store %arg6[%c0_10, %c0_11], %11 {strides = array<i32>} : memref<2x128xf32, #tpu.memory_space<vmem>>, vector<2x128xf32>,
    } else {
    }
    %c0 = arith.constant 0 : index
    %c0_1 = arith.constant 0 : index
    %c0_2 = arith.constant 0 : index
    %3 = vector.load %arg2[%c0, %c0_1, %c0_2] : memref<2x64x128xf32, #tpu.memory_space<vmem>>, vector<2x64x128xf32>
    %c0_3 = arith.constant 0 : index
    %c0_4 = arith.constant 0 : index
    %4 = vector.load %arg6[%c0_3, %c0_4] : memref<2x128xf32, #tpu.memory_space<vmem>>, vector<2x128xf32>
    %cst = arith.constant dense<0.000000e+00> : vector<2x128xf32>
    %5 = vector.multi_reduction <add>, %3, %cst [1] : vector<2x64x128xf32> to vector<2x128xf32>
    %6 = arith.addf %4, %5 : vector<2x128xf32>
    %c0_5 = arith.constant 0 : index
    %c0_6 = arith.constant 0 : index
    %7 = vector.load %arg6[%c0_5, %c0_6] : memref<2x128xf32, #tpu.memory_space<vmem>>, vector<2x128xf32>
    tpu.vector_store %arg6[%c0_5, %c0_6], %6 {strides = array<i32>} : memref<2x128xf32, #tpu.memory_space<vmem>>, vector<2x128xf32>,
    %c0_i32_7 = arith.constant 0 : i32
    %8 = arith.cmpi eq, %arg1, %c0_i32_7 : i32
    %9 = arith.extui %8 : i1 to i32
    %c0_i32_8 = arith.constant 0 : i32
    %10 = arith.cmpi ne, %9, %c0_i32_8 : i32
    scf.if %10 {
      %c0_9 = arith.constant 0 : index
      %c0_10 = arith.constant 0 : index
      %11 = vector.load %arg6[%c0_9, %c0_10] : memref<2x128xf32, #tpu.memory_space<vmem>>, vector<2x128xf32>
      %12 = vector.extract_strided_slice %11 {offsets = [0, 0], sizes = [2, 32], strides = [1, 1]} : vector<2x128xf32> to vector<2x32xf32>
      %13 = vector.extract_strided_slice %11 {offsets = [0, 32], sizes = [2, 32], strides = [1, 1]} : vector<2x128xf32> to vector<2x32xf32>
      %14 = arith.addf %12, %13 : vector<2x32xf32>
      %15 = vector.extract_strided_slice %11 {offsets = [0, 64], sizes = [2, 32], strides = [1, 1]} : vector<2x128xf32> to vector<2x32xf32>
      %16 = arith.addf %14, %15 : vector<2x32xf32>
      %17 = vector.extract_strided_slice %11 {offsets = [0, 96], sizes = [2, 32], strides = [1, 1]} : vector<2x128xf32> to vector<2x32xf32>
      %18 = arith.addf %16, %17 : vector<2x32xf32>
      %c0_11 = arith.constant 0 : index
      %c0_12 = arith.constant 0 : index
      %19 = vector.load %arg3[%c0_11, %c0_12] : memref<32x8xf32, #tpu.memory_space<vmem>>, vector<32x8xf32>
      %cst_13 = arith.constant dense<0.000000e+00> : vector<2x8xf32>
      %20 = tpu.matmul %18, %19, %cst_13 {dimension_numbers = #tpu.dot_dimension_numbers<[1], [0], [0], [1], [0, 0, 1, 1], [], []>} : vector<2x32xf32>, vector<32x8xf32>, vector<2x8xf32> -> vector<2x8xf32>
      %cst_14 = arith.constant 3.906250e-03 : f32
      %21 = vector.broadcast %cst_14 : f32 to vector<2x8xf32>
      %22 = arith.mulf %20, %21 : vector<2x8xf32>
      %c0_15 = arith.constant 0 : index
      %c0_16 = arith.constant 0 : index
      %23 = vector.load %arg4[%c0_15, %c0_16] : memref<1x8xf32, #tpu.memory_space<vmem>>, vector<1x8xf32>
      %24 = vector.broadcast %23 : vector<1x8xf32> to vector<2x8xf32>
      %25 = arith.addf %22, %24 : vector<2x8xf32>
      %c0_17 = arith.constant 0 : index
      %c0_18 = arith.constant 0 : index
      %26 = vector.load %arg5[%c0_17, %c0_18] : memref<2x8xf32, #tpu.memory_space<vmem>>, vector<2x8xf32>
      tpu.vector_store %arg5[%c0_17, %c0_18], %25 {strides = array<i32>} : memref<2x8xf32, #tpu.memory_space<vmem>>, vector<2x8xf32>,
    } else {
    }
    return
  }
  func.func @transform_0(%arg0: i32, %arg1: i32) -> (i32, i32, i32) {
    %c0_i32 = arith.constant 0 : i32
    %c0_i32_0 = arith.constant 0 : i32
    return %arg0, %arg1, %c0_i32 : i32, i32, i32
  }
  func.func @transform_1(%arg0: i32, %arg1: i32) -> (i32, i32) {
    %c0_i32 = arith.constant 0 : i32
    %c0_i32_0 = arith.constant 0 : i32
    %c0_i32_1 = arith.constant 0 : i32
    return %c0_i32, %c0_i32_0 : i32, i32
  }
  func.func @transform_2(%arg0: i32, %arg1: i32) -> (i32, i32) {
    %c0_i32 = arith.constant 0 : i32
    %c0_i32_0 = arith.constant 0 : i32
    %c0_i32_1 = arith.constant 0 : i32
    return %c0_i32, %c0_i32_0 : i32, i32
  }
  func.func @transform_3(%arg0: i32, %arg1: i32) -> (i32, i32) {
    %c0_i32 = arith.constant 0 : i32
    %c0_i32_0 = arith.constant 0 : i32
    return %arg0, %c0_i32 : i32, i32
  }
}

</mosaic_0001>

<llo_original>
// kernel: tpu_custom_call.1
$region0: #{tpu_custom_call.1}
  #allocation0 [shape = 'u32[]', space=smem, size = 0x4, offset = 0x4, fixed_abs, tag = 'smem constant byte address 0x4 - core index']
  #allocation1 [shape = 'u32[144,128]{1,0:T(1,128)}', space=vmem, size = 0x12000, scoped, tag = 'internal scratch']
  #allocation2 [shape = 'f32[2,128]{1,0:T(2,128)}', space=vmem, size = 0x400, scoped, tag = 'scratch operand']
  %s0 = inlined_call_operand.hbm [shape: f32[2,64,128], index: 0, kind: input, shape index: {}]
  %s1 = inlined_call_operand.vmem [shape: f32[32,8], index: 1, kind: input, shape index: {}]
  %s2 = inlined_call_operand.vmem [shape: f32[1,8], index: 2, kind: input, shape index: {}]
  %s3 = inlined_call_operand.hbm [shape: f32[2,8], index: 3, kind: output, shape index: {}]
  %s4 = sld [smem:[#allocation0]]
  $region34: #{tpu_custom_call.1} parent=0
    _
  %s6 = ssub.s32 1, %s4
  %s7 = scalar_select 0, %s6, %s4
  $region1: #{tpu_custom_call.1} parent=0
    #allocation3 [shape = 'u8[65536]{0}', space=vmem, size = 0x10000, scoped, tag = 'input window, operand 0, single buffered']
    #allocation4 [shape = 's32[1]{0}', space=sflag, size = 0x4, scoped, tag = 'scoped memory for tpu_custom_call.1']
    #allocation5 [shape = 's32[1]{0}', space=sflag, size = 0x4, scoped, tag = 'scoped memory for tpu_custom_call.1']
    #allocation6 [shape = 'u8[1024]{0}', space=vmem, size = 0x400, scoped, tag = 'output window, operand 0, single buffered']
    %8 = vsyncpa [#allocation4], 0
    %9 = vsyncpa [#allocation5], 0
    // Predicated region
    $region2: #{tpu_custom_call.1} parent=1 // pred_check
      _
    $region3: #{tpu_custom_call.1} parent=1 // pred_check_branch
      %11 = sbr.rel (0) target = $region5
    $region4: #{tpu_custom_call.1} parent=1 // pred_region
      %s13 = ssub.s32 2048, 2048
      %14 = vsyncadd [#allocation4], %s13
      %s15 = sshll.u32 [#allocation3], 4
      %s16 = int_to_ptr.vmem [resolvable:$true] %s15
      %21 = dma.hbm_to_vmem [thread:$0]  %s0, 2048, %s16, [#allocation4], 128, 128, 8
    $region5: #{tpu_custom_call.1} parent=1 // pred_fallthru
      _
    // Predicated region
    $region6: #{tpu_custom_call.1} parent=1 // pred_check
      _
    $region7: #{tpu_custom_call.1} parent=1 // pred_check_branch
      %23 = sbr.rel (0) target = $region9
    $region8: #{tpu_custom_call.1} parent=1 // pred_region
      _
    $region9: #{tpu_custom_call.1} parent=1 // pred_fallthru
      _
    // Predicated region
    $region10: #{tpu_custom_call.1} parent=1 // pred_check
      _
    $region11: #{tpu_custom_call.1} parent=1 // pred_check_branch
      %25 = sbr.rel (0) target = $region13
    $region12: #{tpu_custom_call.1} parent=1 // pred_region
      _
    $region13: #{tpu_custom_call.1} parent=1 // pred_fallthru
      _
    // Predicated region
    $region14: #{tpu_custom_call.1} parent=1 // pred_check
      _
    $region15: #{tpu_custom_call.1} parent=1 // pred_check_branch
      %27 = sbr.rel (0) target = $region17
    $region16: #{tpu_custom_call.1} parent=1 // pred_region
      %28 = dma.done [#allocation4], 2048
    $region17: #{tpu_custom_call.1} parent=1 // pred_fallthru
      _
    %p29 = scmp.eq.s32.totalorder 0, 0
    // Predicated region
    $region18: #{tpu_custom_call.1} parent=1 // pred_check
      %p30 = pneg %p29
    $region19: #{tpu_custom_call.1} parent=1 // pred_check_branch
      %32 = sbr.rel (%p30) target = $region21
    $region20: #{tpu_custom_call.1} parent=1 // pred_region
      %33 = vst [vmem:[#allocation2] sm:$0x3] 0.0
    $region21: #{tpu_custom_call.1} parent=1 // pred_fallthru
      _
    %v34 = vld [vmem:[#allocation3] sm:$0xff]
    %v35 = vld [vmem:[#allocation3 + $0x8] sm:$0xff]
    %v36 = vld [vmem:[#allocation3 + $0x10] sm:$0xff]
    %v37 = vld [vmem:[#allocation3 + $0x18] sm:$0xff]
    %v38 = vld [vmem:[#allocation3 + $0x20] sm:$0xff]
    %v39 = vld [vmem:[#allocation3 + $0x28] sm:$0xff]
    %v40 = vld [vmem:[#allocation3 + $0x30] sm:$0xff]
    %v41 = vld [vmem:[#allocation3 + $0x38] sm:$0xff]
    %v42 = vld [vmem:[#allocation3 + $0x40] sm:$0xff]
    %v43 = vld [vmem:[#allocation3 + $0x48] sm:$0xff]
    %v44 = vld [vmem:[#allocation3 + $0x50] sm:$0xff]
    %v45 = vld [vmem:[#allocation3 + $0x58] sm:$0xff]
    %v46 = vld [vmem:[#allocation3 + $0x60] sm:$0xff]
    %v47 = vld [vmem:[#allocation3 + $0x68] sm:$0xff]
    %v48 = vld [vmem:[#allocation3 + $0x70] sm:$0xff]
    %v49 = vld [vmem:[#allocation3 + $0x78] sm:$0xff]
    %v50 = vld [vmem:[#allocation2] sm:$0x3]
    %v51 = vadd.f32 %v34, %v35
    %v52 = vadd.f32 %v51, %v36
    %v53 = vadd.f32 %v52, %v37
    %v54 = vadd.f32 %v53, %v38
    %v55 = vadd.f32 %v54, %v39
    %v56 = vadd.f32 %v55, %v40
    %v57 = vadd.f32 %v56, %v41
    %v58 = vrot.slane %v57, 4
    %v59 = vadd.f32 %v57, %v58
    %v60 = vrot.slane %v59, 2
    %v61 = vadd.f32 %v59, %v60
    %v62 = vrot.slane %v61, 1
    %v63 = vadd.f32 %v61, %v62
    %v64 = vadd.f32 %v42, %v43
    %v65 = vadd.f32 %v64, %v44
    %v66 = vadd.f32 %v65, %v45
    %v67 = vadd.f32 %v66, %v46
    %v68 = vadd.f32 %v67, %v47
    %v69 = vadd.f32 %v68, %v48
    %v70 = vadd.f32 %v69, %v49
    %v71 = vrot.slane %v70, 4
    %v72 = vadd.f32 %v70, %v71
    %v73 = vrot.slane %v72, 2
    %v74 = vadd.f32 %v72, %v73
    %v75 = vrot.slane %v74, 1
    %v76 = vadd.f32 %v74, %v75
    %vm79 = vcmask 1041409
    %v80 = vsel %vm79, %v76, %v63
    %v82 = vadd.f32 %v50, %v80
    %83 = vst [vmem:[#allocation2] sm:$0x3] %v82
    // Predicated region
    $region22: #{tpu_custom_call.1} parent=1 // pred_check
      %p84 = pneg %p29
    $region23: #{tpu_custom_call.1} parent=1 // pred_check_branch
      %86 = sbr.rel (%p84) target = $region25
    $region24: #{tpu_custom_call.1} parent=1 // pred_region
      %v87 = vld [vmem:[#allocation2] sm:$0x3]
      %89 = vrot.lane.b32.xlu0 %v87, 96
      %v90 = vpop.permute.xlu0 %89
      %v92 = vadd.f32 %v87, %v90
      %93 = vrot.lane.b32.xlu0 %v87, 64
      %v94 = vpop.permute.xlu0 %93
      %v96 = vadd.f32 %v92, %v94
      %97 = vrot.lane.b32.xlu0 %v87, 32
      %v98 = vpop.permute.xlu0 %97
      %v100 = vadd.f32 %v96, %v98
      %v101 = vld [vmem:[%s1] sm:$0xff]
      %v102 = vld [vmem:[%s1 + $0x8] sm:$0xff]
      %v103 = vld [vmem:[%s1 + $0x10] sm:$0xff]
      %v104 = vld [vmem:[%s1 + $0x18] sm:$0xff]
      %vm105 = vcmask 261120
      %v107 = vsel %vm105, %v100, 0
      %109 = vmatprep.subr.mxu0 0.0
      %110 = vmatpush1.msra.mxu0 %v101
      %111 = vmatprep.subr.mxu0 0.0
      %112 = vmatpush1.msra.mxu0 %v102
      %113 = vmatprep.subr.mxu0 0.0
      %114 = vmatpush1.msra.mxu0 %v103
      %115 = vmatprep.subr.mxu0 0.0
      %116 = vmatpush1.msra.mxu0 %v104
      %117 = vmatprep.subr.mxu0 0.0
      %118 = vmatpush1.msra.mxu0 0.0
      %119 = vmatprep.subr.mxu0 0.0
      %120 = vmatpush1.msra.mxu0 0.0
      %121 = vmatprep.subr.mxu0 0.0
      %122 = vmatpush1.msra.mxu0 0.0
      %123 = vmatprep.subr.mxu0 0.0
      %124 = vmatpush1.msra.mxu0 0.0
      %125 = vmatprep.subr.mxu0 0.0
      %126 = vmatpush1.msra.mxu0 0.0
      %127 = vmatprep.subr.mxu0 0.0
      %128 = vmatpush1.msra.mxu0 0.0
      %129 = vmatprep.subr.mxu0 0.0
      %130 = vmatpush1.msra.mxu0 0.0
      %131 = vmatprep.subr.mxu0 0.0
      %132 = vmatpush1.msra.mxu0 0.0
      %133 = vmatprep.subr.mxu0 0.0
      %134 = vmatpush1.msra.mxu0 0.0
      %135 = vmatprep.subr.mxu0 0.0
      %136 = vmatpush1.msra.mxu0 0.0
      %137 = vmatprep.subr.mxu0 0.0
      %138 = vmatpush1.msra.mxu0 0.0
      %139 = vmatprep.subr.mxu0 0.0
      %140 = vmatpush1.msra.mxu0 0.0
      %141 = vmatprep.subr.mxu0 0.0
      %142 = vmatpush1.msra.mxu0 0.0
      %143 = vmatprep.subr.mxu0 0.0
      %144 = vmatpush1.msra.mxu0 0.0
      %145 = vmatprep.subr.mxu0 0.0
      %146 = vmatpush1.msra.mxu0 0.0
      %147 = vmatprep.subr.mxu0 0.0
      %148 = vmatpush1.msra.mxu0 0.0
      %149 = vmatprep.subr.mxu0 0.0
      %150 = vmatpush1.msra.mxu0 0.0
      %151 = vmatprep.subr.mxu0 0.0
      %152 = vmatpush1.msra.mxu0 0.0
      %153 = vmatprep.subr.mxu0 0.0
      %154 = vmatpush1.msra.mxu0 0.0
      %155 = vmatprep.subr.mxu0 0.0
      %156 = vmatpush1.msra.mxu0 0.0
      %157 = vmatprep.subr.mxu0 0.0
      %158 = vmatpush1.msra.mxu0 0.0
      %159 = vmatprep.subr.mxu0 0.0
      %160 = vmatpush1.msra.mxu0 0.0
      %161 = vmatprep.subr.mxu0 0.0
      %162 = vmatpush1.msra.mxu0 0.0
      %163 = vmatprep.subr.mxu0 0.0
      %164 = vmatpush1.msra.mxu0 0.0
      %165 = vmatprep.subr.mxu0 0.0
      %166 = vmatpush1.msra.mxu0 0.0
      %167 = vmatprep.subr.mxu0 0.0
      %168 = vmatpush1.msra.mxu0 0.0
      %169 = vmatprep.subr.mxu0 0.0
      %170 = vmatpush1.msra.mxu0 0.0
      %171 = vmatprep.subr.mxu0 0.0
      %172 = vmatpush1.msra.mxu0 0.0
      %173 = vmatprep.mubr.f32.mxu0 0.0
      %174 = vmatmul.mubr.f32.gmra.mrb[0].mxu0 %v107
      %v175 = vpop.f32.mrb[0].mxu0
      %v176 = vadd.f32 0.0, %v175
      %v177 = vpop.f32.mrb[0].mxu0
      %178 = vdwg.mxu0
      %v179 = vmul.f32 %v176, 0.00390625
      %v180 = vld [vmem:[%s2] sm:$0x1]
      %v182 = vlaneseq
      %v183 = vshrl.u32 %v182, 7
      %v184 = vsub.s32 0, %v183
      %v185 = vrot.slane %v180, %v184
      %v187 = vadd.f32 %v179, %v185
      %vm188 = vcmask 58368
      %189 = vst.msk [vmem:[#allocation6] sm:$0x3] %vm188, %v187
    $region25: #{tpu_custom_call.1} parent=1 // pred_fallthru
      _
    // Predicated region
    $region26: #{tpu_custom_call.1} parent=1 // pred_check
      _
    $region27: #{tpu_custom_call.1} parent=1 // pred_check_branch
      %191 = sbr.rel (0) target = $region29
    $region28: #{tpu_custom_call.1} parent=1 // pred_region
      %s193 = ssub.s32 32, 32
      %194 = vsyncadd [#allocation5], %s193
      %s196 = sshll.u32 [#allocation6], 4
      %s197 = int_to_ptr.vmem [resolvable:$true] %s196
      %199 = dma.vmem_to_hbm [thread:$0]  %s197, 32, %s3, [#allocation5]
    $region29: #{tpu_custom_call.1} parent=1 // pred_fallthru
      _
    // Predicated region
    $region30: #{tpu_custom_call.1} parent=1 // pred_check
      _
    $region31: #{tpu_custom_call.1} parent=1 // pred_check_branch
      %201 = sbr.rel (0) target = $region33
    $region32: #{tpu_custom_call.1} parent=1 // pred_region
      %202 = dma.done [#allocation5], 32
    $region33: #{tpu_custom_call.1} parent=1 // pred_fallthru
      _
    %203 = vsyncpa [#allocation4], 1
    %204 = vsyncpa [#allocation5], 1

</llo_original>
